<compile_context>
chip_gen: v5e
topology: v5e:2x2
jax: 0.10.0
libtpu: 0.0.40
codegen_flags: <defaults>
</compile_context>

<pallas_src>
import functools

import jax
import jax.numpy as jnp
from jax.experimental import pallas as pl
from jax.experimental.pallas import tpu as pltpu


def _round_up(x, m):
    return (x + m - 1) // m * m


def _pick_tile(size, align, cap, min_tile=None):
    """Pick tile (multiple of `align`, <= cap) minimizing padding of `size`."""
    padded = _round_up(size, align)
    if padded <= cap:
        return padded, padded  # single block, zero extra padding
    lo = max(align, min_tile or align)
    best_t, best_p = cap, _round_up(padded, cap)
    for t in range(lo, cap + 1, align):
        p = _round_up(padded, t)
        if p < best_p or (p == best_p and t > best_t):
            best_t, best_p = t, p
    return best_t, best_p


def _linear_kernel(x_ref, wt_ref, b_ref, o_ref):
    # x_ref:  (tm, tk)  VMEM  activations
    # wt_ref: (tk, tn)  VMEM  weight already staged as (D_in, D_out) tile
    # b_ref:  (1, tn)   VMEM  f32 bias tile
    # o_ref:  (tm, tn)  VMEM  f32 output tile; K-resident -> doubles as accumulator
    k = pl.program_id(2)

    @pl.when(k == 0)
    def _():
        # Fold the bias into the accumulator init (no separate epilogue add).
        o_ref[...] = jnp.broadcast_to(b_ref[...], o_ref.shape)

    # Default MXU precision; accumulate in f32.
    o_ref[...] += jnp.dot(x_ref[...], wt_ref[...],
                          preferred_element_type=jnp.float32)


@jax.jit
def linear_forward(x, weight, bias):
    """y = x @ weight.T + bias  (matches torch.nn.Linear semantics)."""
    B, D_in = x.shape
    D_out = weight.shape[0]
    out_dtype = x.dtype

    # Stage the weight once as (D_in, D_out): the kernel then does a plain
    # (M,K)@(K,N) contraction with no per-tile transpose.
    # TODO(synk): in a real model, transpose/pad the weight once at load time
    # instead of per forward call (weight prep dominates at small batch).
    wt = weight.T
    b2 = bias.reshape(1, D_out).astype(jnp.float32)

    # ---- small-problem fast path: one full-array block, zero padding --------
    small = (B * D_in + D_in * D_out + B * D_out) * 4 <= 2 * 1024 * 1024
    if small:
        grid = (1, 1, 1)
        Bp, Kp, Np = B, D_in, D_out
        tm, tk, tn = B, D_in, D_out
        x_p, wt_p, b_p = x, wt, b2
    else:
        # ---- tiled path ------------------------------------------------------
        tm, Bp = _pick_tile(B, 8, 512, min_tile=64)
        tk, Kp = _pick_tile(D_in, 128, 1024)
        tn, Np = _pick_tile(D_out, 128, 512)
        # v7x megacore: if M collapses to a single block, split N across cores.
        if Bp // tm == 1 and Np // tn == 1 and Np % 256 == 0:
            tn = Np // 2
        x_p = x if (Bp, Kp) == (B, D_in) else jnp.pad(
            x, ((0, Bp - B), (0, Kp - D_in)))
        wt_p = wt if (Kp, Np) == (D_in, D_out) else jnp.pad(
            wt, ((0, Kp - D_in), (0, Np - D_out)))
        b_p = b2 if Np == D_out else jnp.pad(b2, ((0, 0), (0, Np - D_out)))
        grid = (Bp // tm, Np // tn, Kp // tk)

    cost = pl.CostEstimate(
        flops=2 * Bp * Kp * Np,
        transcendentals=0,
        bytes_accessed=4 * (Bp * Kp + Kp * Np + Bp * Np + Np))

    y_p = pl.pallas_call(
        _linear_kernel,
        out_shape=jax.ShapeDtypeStruct((Bp, Np), jnp.float32),
        grid_spec=pltpu.PrefetchScalarGridSpec(
            num_scalar_prefetch=0,
            grid=grid,
            in_specs=[
                pl.BlockSpec((tm, tk), lambda i, j, k: (i, k)),   # x
                pl.BlockSpec((tk, tn), lambda i, j, k: (k, j)),   # weight.T (K, N)
                pl.BlockSpec((1, tn), lambda i, j, k: (0, j)),    # bias
            ],
            out_specs=pl.BlockSpec((tm, tn), lambda i, j, k: (i, j)),
        ),
        compiler_params=pltpu.CompilerParams(
            dimension_semantics=("parallel", "parallel", "arbitrary"),
            vmem_limit_bytes=48 * 1024 * 1024),
        cost_estimate=cost,
    )(x_p, wt_p, b_p)

    y = y_p if (Bp, Np) == (B, D_out) else y_p[:B, :D_out]
    return y.astype(out_dtype)


if __name__ == "__main__":
    # Small shapes implied by the module: batch=8, input_dim=32, output_dim=16.
    batch, input_dim, output_dim = 8, 32, 16

    key = jax.random.PRNGKey(0)
    kx, kw, kb = jax.random.split(key, 3)

    x = jax.random.normal(kx, (batch, input_dim), dtype=jnp.float32)
    # Deterministic init mimicking nn.Linear's uniform(-1/sqrt(fan_in), +).
    bound = 1.0 / jnp.sqrt(jnp.float32(input_dim))
    weight = jax.random.uniform(kw, (output_dim, input_dim),
                                minval=-bound, maxval=bound, dtype=jnp.float32)
    bias = jax.random.uniform(kb, (output_dim,),
                              minval=-bound, maxval=bound, dtype=jnp.float32)

    y = linear_forward(x, weight, bias)
    jax.block_until_ready(y)

    # Sanity check against plain-JAX reference.
    y_ref = x @ weight.T + bias
    assert y.shape == (batch, output_dim)
    assert jnp.allclose(y, y_ref, atol=1e-5, rtol=1e-5)

    print("KERNEL_OK")
</pallas_src>

<mosaic_0001>
module attributes {stable_mosaic.version = 11 : i64} {
  func.func @_linear_kernel(%arg0: i32, %arg1: i32, %arg2: i32, %arg3: memref<8x32xf32, #tpu.memory_space<vmem>>, %arg4: memref<32x16xf32, #tpu.memory_space<vmem>>, %arg5: memref<1x16xf32, #tpu.memory_space<vmem>>, %arg6: memref<8x16xf32, #tpu.memory_space<vmem>>) attributes {dimension_semantics = [#tpu.dimension_semantics<parallel>, #tpu.dimension_semantics<parallel>, #tpu.dimension_semantics<arbitrary>], iteration_bounds = array<i64: 1, 1, 1>, scalar_prefetch = 0 : i64, scratch_operands = 0 : i64, tpu.core_type = #tpu.core_type<tc>, window_params = [{transform_indices = @transform_0, window_bounds = array<i64: 8, 32>}, {transform_indices = @transform_1, window_bounds = array<i64: 32, 16>}, {transform_indices = @transform_2, window_bounds = array<i64: 1, 16>}, {transform_indices = @transform_3, window_bounds = array<i64: 8, 16>}]} {
    %c0_i32 = arith.constant 0 : i32
    %0 = arith.cmpi eq, %arg2, %c0_i32 : i32
    %1 = arith.extui %0 : i1 to i32
    %c0_i32_0 = arith.constant 0 : i32
    %2 = arith.cmpi ne, %1, %c0_i32_0 : i32
    scf.if %2 {
      %c0_8 = arith.constant 0 : index
      %c0_9 = arith.constant 0 : index
      %9 = vector.load %arg5[%c0_8, %c0_9] : memref<1x16xf32, #tpu.memory_space<vmem>>, vector<1x16xf32>
      %10 = vector.shape_cast %9 : vector<1x16xf32> to vector<1x16xf32>
      %11 = vector.broadcast %10 : vector<1x16xf32> to vector<8x16xf32>
      %c0_10 = arith.constant 0 : index
      %c0_11 = arith.constant 0 : index
      %12 = vector.load %arg6[%c0_10, %c0_11] : memref<8x16xf32, #tpu.memory_space<vmem>>, vector<8x16xf32>
      tpu.vector_store %arg6[%c0_10, %c0_11], %11 {strides = array<i32>} : memref<8x16xf32, #tpu.memory_space<vmem>>, vector<8x16xf32>,
    } else {
    }
    %c0 = arith.constant 0 : index
    %c0_1 = arith.constant 0 : index
    %3 = vector.load %arg6[%c0, %c0_1] : memref<8x16xf32, #tpu.memory_space<vmem>>, vector<8x16xf32>
    %c0_2 = arith.constant 0 : index
    %c0_3 = arith.constant 0 : index
    %4 = vector.load %arg3[%c0_2, %c0_3] : memref<8x32xf32, #tpu.memory_space<vmem>>, vector<8x32xf32>
    %c0_4 = arith.constant 0 : index
    %c0_5 = arith.constant 0 : index
    %5 = vector.load %arg4[%c0_4, %c0_5] : memref<32x16xf32, #tpu.memory_space<vmem>>, vector<32x16xf32>
    %cst = arith.constant dense<0.000000e+00> : vector<8x16xf32>
    %6 = tpu.matmul %4, %5, %cst {dimension_numbers = #tpu.dot_dimension_numbers<[1], [0], [0], [1], [0, 0, 1, 1], [], []>} : vector<8x32xf32>, vector<32x16xf32>, vector<8x16xf32> -> vector<8x16xf32>
    %7 = arith.addf %3, %6 : vector<8x16xf32>
    %c0_6 = arith.constant 0 : index
    %c0_7 = arith.constant 0 : index
    %8 = vector.load %arg6[%c0_6, %c0_7] : memref<8x16xf32, #tpu.memory_space<vmem>>, vector<8x16xf32>
    tpu.vector_store %arg6[%c0_6, %c0_7], %7 {strides = array<i32>} : memref<8x16xf32, #tpu.memory_space<vmem>>, vector<8x16xf32>,
    return
  }
  func.func @transform_0(%arg0: i32, %arg1: i32, %arg2: i32) -> (i32, i32) {
    %c0_i32 = arith.constant 0 : i32
    return %arg0, %arg2 : i32, i32
  }
  func.func @transform_1(%arg0: i32, %arg1: i32, %arg2: i32) -> (i32, i32) {
    %c0_i32 = arith.constant 0 : i32
    return %arg2, %arg1 : i32, i32
  }
  func.func @transform_2(%arg0: i32, %arg1: i32, %arg2: i32) -> (i32, i32) {
    %c0_i32 = arith.constant 0 : i32
    %c0_i32_0 = arith.constant 0 : i32
    return %c0_i32, %arg1 : i32, i32
  }
  func.func @transform_3(%arg0: i32, %arg1: i32, %arg2: i32) -> (i32, i32) {
    %c0_i32 = arith.constant 0 : i32
    return %arg0, %arg1 : i32, i32
  }
}

</mosaic_0001>

<llo_original>
// kernel: linear_forward.1
$region0: #{linear_forward.1}
  #allocation0 [shape = 'u32[]', space=smem, size = 0x4, offset = 0x4, fixed_abs, tag = 'smem constant byte address 0x4 - core index']
  #allocation1 [shape = 'u32[72,128]{1,0:T(1,128)}', space=vmem, size = 0x9000, scoped, tag = 'internal scratch']
  %s0 = inlined_call_operand.vmem [shape: f32[8,32], index: 0, kind: input, shape index: {}]
  %s1 = inlined_call_operand.vmem [shape: f32[32,16], index: 1, kind: input, shape index: {}]
  %s2 = inlined_call_operand.vmem [shape: f32[1,16], index: 2, kind: input, shape index: {}]
  %s3 = inlined_call_operand.hbm [shape: f32[8,16], index: 3, kind: output, shape index: {}]
  %s4 = sld [smem:[#allocation0]]
  $region26: #{linear_forward.1} parent=0
    _
  %s6 = ssub.s32 1, %s4
  %s7 = scalar_select 0, %s6, %s4
  $region1: #{linear_forward.1} parent=0
    #allocation2 [shape = 'u8[4096]{0}', space=vmem, size = 0x1000, scoped, tag = 'output window, operand 0, single buffered']
    #allocation3 [shape = 's32[1]{0}', space=sflag, size = 0x4, scoped, tag = 'scoped memory for linear_forward.1']
    %8 = vsyncpa [#allocation3], 0
    // Predicated region
    $region2: #{linear_forward.1} parent=1 // pred_check
      _
    $region3: #{linear_forward.1} parent=1 // pred_check_branch
      %10 = sbr.rel (0) target = $region5
    $region4: #{linear_forward.1} parent=1 // pred_region
      _
    $region5: #{linear_forward.1} parent=1 // pred_fallthru
      _
    // Predicated region
    $region6: #{linear_forward.1} parent=1 // pred_check
      _
    $region7: #{linear_forward.1} parent=1 // pred_check_branch
      %12 = sbr.rel (0) target = $region9
    $region8: #{linear_forward.1} parent=1 // pred_region
      _
    $region9: #{linear_forward.1} parent=1 // pred_fallthru
      _
    // Predicated region
    $region10: #{linear_forward.1} parent=1 // pred_check
      _
    $region11: #{linear_forward.1} parent=1 // pred_check_branch
      %14 = sbr.rel (0) target = $region13
    $region12: #{linear_forward.1} parent=1 // pred_region
      _
    $region13: #{linear_forward.1} parent=1 // pred_fallthru
      _
    %p15 = scmp.eq.s32.totalorder 0, 0
    // Predicated region
    $region14: #{linear_forward.1} parent=1 // pred_check
      %p16 = pneg %p15
    $region15: #{linear_forward.1} parent=1 // pred_check_branch
      %18 = sbr.rel (%p16) target = $region17
    $region16: #{linear_forward.1} parent=1 // pred_region
      %v19 = vld [vmem:[%s2] sm:$0x1]
      %v21 = vperm.slane %v19, 0
      %vm23 = vcmask 130048
      %24 = vst.msk [vmem:[#allocation2] sm:$0xff] %vm23, %v21
    $region17: #{linear_forward.1} parent=1 // pred_fallthru
      _
    %v25 = vld [vmem:[#allocation2] sm:$0xff]
    %v26 = vld [vmem:[%s0] sm:$0xff]
    %v27 = vld [vmem:[%s1] sm:$0xff]
    %v28 = vld [vmem:[%s1 + $0x8] sm:$0xff]
    %v29 = vld [vmem:[%s1 + $0x10] sm:$0xff]
    %v30 = vld [vmem:[%s1 + $0x18] sm:$0xff]
    %vm31 = vcmask 261120
    %v33 = vsel %vm31, %v26, 0
    %35 = vmatpush.msra.mxu0 0.0
    %36 = vmatpush.msra.mxu0 0.0
    %37 = vmatpush.msra.mxu0 0.0
    %38 = vmatpush.msra.mxu0 0.0
    %39 = vmatpush.msra.mxu0 0.0
    %40 = vmatpush.msra.mxu0 0.0
    %41 = vmatpush.msra.mxu0 0.0
    %42 = vmatpush.msra.mxu0 0.0
    %43 = vmatpush.msra.mxu0 0.0
    %44 = vmatpush.msra.mxu0 0.0
    %45 = vmatpush.msra.mxu0 0.0
    %46 = vmatpush.msra.mxu0 0.0
    %47 = vmatpush.msra.mxu0 %v30
    %48 = vmatpush.msra.mxu0 %v29
    %49 = vmatpush.msra.mxu0 %v28
    %50 = vmatpush.msra.mxu0 %v27
    %51 = vmatmul.f32.gmra.mxu0 %v33
    %v52 = vpop.f32.mrf.mxu0
    %v53 = vadd.f32 0.0, %v52
    %54 = vdwg.mxu0
    %v55 = vadd.f32 %v25, %v53
    %vm56 = vcmask 130048
    %57 = vst.msk [vmem:[#allocation2] sm:$0xff] %vm56, %v55
    // Predicated region
    $region18: #{linear_forward.1} parent=1 // pred_check
      _
    $region19: #{linear_forward.1} parent=1 // pred_check_branch
      %59 = sbr.rel (0) target = $region21
    $region20: #{linear_forward.1} parent=1 // pred_region
      %61 = vsyncadd [#allocation3], 0
      %s63 = sshll.u32 [#allocation2], 4
      %s64 = int_to_ptr.vmem [resolvable:$true] %s63
      %s65 = sshll.u32 %s3, 4
      %s66 = int_to_ptr.hbm [resolvable:$true] %s65
      %68 = dma.vmem_to_hbm [thread:$0]  %s64, 128, %s66, [#allocation3]
    $region21: #{linear_forward.1} parent=1 // pred_fallthru
      _
    // Predicated region
    $region22: #{linear_forward.1} parent=1 // pred_check
      _
    $region23: #{linear_forward.1} parent=1 // pred_check_branch
      %70 = sbr.rel (0) target = $region25
    $region24: #{linear_forward.1} parent=1 // pred_region
      %72 = dma.done [#allocation3], 128
    $region25: #{linear_forward.1} parent=1 // pred_fallthru
      _
    %73 = vsyncpa [#allocation3], 1

</llo_original>
